<compile_context>
chip_gen: v7x
topology: tpu7x:2x2x1
jax: 0.10.0
libtpu: 0.0.40
codegen_flags: <defaults>
</compile_context>

<pallas_src>
import functools

import jax
import jax.numpy as jnp
from jax.experimental import pallas as pl
from jax.experimental.pallas import tpu as pltpu


# ---------------------------------------------------------------------------
# One-time direction probe for pltpu.roll (defensive: guarantees the lane-roll
# shift sign matches jnp.roll semantics regardless of backend convention).
# ---------------------------------------------------------------------------
@functools.lru_cache(maxsize=None)
def _pltpu_roll_matches_jnp() -> bool:
    n = 128
    x = jnp.arange(8 * n, dtype=jnp.float32).reshape(8, n)

    def probe(x_ref, o_ref):
        o_ref[...] = pltpu.roll(x_ref[...], 1, axis=1)

    y = pl.pallas_call(
        probe, out_shape=jax.ShapeDtypeStruct((8, n), jnp.float32))(x)
    # jnp.roll(x, 1, axis=1)[0, 0] == x[0, n-1]
    return bool(y[0, 0] == x[0, n - 1])


def _conv_tap_rolls(H, W, roll_sign):
    """Lane-roll amounts for a 3x3 zero-padded conv.

    For tap (dy, dx): oy=dy-1, ox=dx-1, flattened spatial shift s = oy*W + ox.
    The rolled tap must hold x[p + s] at lane p (wrap-around lanes are masked).
    """
    HW = H * W
    rolls = []
    for dy in range(3):
        for dx in range(3):
            s = (dy - 1) * W + (dx - 1)
            rolls.append((-roll_sign * s) % HW)
    return tuple(rolls)


def _vmem_limit_bytes():
    # Generation-aware VMEM budget: ~75% of physical per-core VMEM
    # (v5e/v6e 128 MiB -> 96 MiB, v7x 64 MiB -> 48 MiB), with a safe fallback.
    try:
        cap = pltpu.get_tpu_info().vmem_capacity_bytes
        return int(cap * 3 // 4)
    except Exception:  # noqa: BLE001 - info query unavailable on this build
        return 64 * 1024 * 1024


# ---------------------------------------------------------------------------
# Kernel
# ---------------------------------------------------------------------------
def resblock_kernel(x_ref, w1_ref, w2_ref, col_ref, o_ref,
                    *, H, W, rolls, eps, tap_dtype):
    """One image per grid step.

    x_ref:   (1, C, HW)  channels on sublanes, flattened H*W on lanes
    w*_ref:  (9, C, C)   bf16; w9[dy*3+dx, co, ci] = w[co, ci, dy, dx]
    col_ref: (1, HW)     int32 column index (w) of each flattened position
    o_ref:   (1, C, HW)
    """
    _, C, HW = x_ref.shape
    inv_hw = 1.0 / HW

    # Edge-validity masks for the 8 non-centre taps, built in-kernel from a
    # lane iota + the column-index row (replaces the DMA'd (9, HW) f32 masks).
    lane = jax.lax.broadcasted_iota(jnp.int32, (1, HW), 1)
    col = col_ref[...]
    row_ok = {-1: lane >= W, 0: None, 1: lane < (H - 1) * W}
    col_ok = {-1: col >= 1, 0: None, 1: col <= W - 2}
    masks = []
    for tap in range(9):
        oy, ox = tap // 3 - 1, tap % 3 - 1
        m = None
        for mpart in (row_ok[oy], col_ok[ox]):
            if mpart is not None:
                m = mpart if m is None else jnp.logical_and(m, mpart)
        masks.append(m)                     # None => all-valid centre tap

    def conv3x3(inp, w_ref):
        # 9-tap accumulation instead of a materialised (9C, HW) im2col scratch:
        # per tap one lane-roll (XLU) + edge select (VPU) feeds a (C,C)x(C,HW)
        # bf16 MXU matmul with f32 accumulation, so the roll/select of tap t+1
        # overlaps the matmul of tap t and there is no VMEM store/reload.
        # TODO(synk): at production C (>=128) group taps in threes (K=3C) to
        # keep the 256-deep MXU contraction well utilised on v6e/v7x.
        inp_t = inp.astype(tap_dtype)
        acc = None
        for tap in range(9):
            shifted = inp_t if rolls[tap] == 0 else pltpu.roll(
                inp_t, rolls[tap], axis=1)
            if masks[tap] is not None:
                shifted = jnp.where(masks[tap], shifted, 0)
            part = jnp.dot(w_ref[tap], shifted.astype(jnp.bfloat16),
                           preferred_element_type=jnp.float32)
            acc = part if acc is None else acc + part
        # Conv bias intentionally omitted: it is cancelled exactly by the
        # following InstanceNorm2d(affine=False).
        return acc

    def instance_norm(y):
        # Stats, rsqrt and normalisation stay in f32 (v5e has no bf16 VPU/EUP).
        # Single-pass E[y^2]-E[y]^2 in f32; fine at these scales.
        mean = jnp.sum(y, axis=1, keepdims=True) * inv_hw
        meansq = jnp.sum(y * y, axis=1, keepdims=True) * inv_hw
        var = meansq - mean * mean
        return (y - mean) * jax.lax.rsqrt(var + eps)

    # Block 1: conv3x3 -> InstanceNorm -> ReLU
    h = jnp.maximum(instance_norm(conv3x3(x_ref[0], w1_ref)), 0.0)
    # Block 2: conv3x3 -> InstanceNorm (no activation)
    h = instance_norm(conv3x3(h, w2_ref))
    # Residual: re-read the VMEM-resident input block at the store instead of
    # keeping a second full-size f32 copy live across both conv blocks.
    o_ref[0] = (x_ref[0].astype(jnp.float32) + h).astype(o_ref.dtype)


# ---------------------------------------------------------------------------
# Wrapper (PyTorch-facing NCHW API)
# ---------------------------------------------------------------------------
def resblock_pallas(x_nchw, w1, b1, w2, b2, *, eps=1e-5):
    """x_nchw: (N, C, H, W); w*: (C, C, 3, 3); b*: (C,)."""
    # Per-channel conv bias is mathematically cancelled by the following
    # InstanceNorm(affine=False); drop it (zero-cost, zero numerical change).
    del b1, b2
    N, C, H, W = x_nchw.shape
    HW = H * W

    x2 = x_nchw.reshape(N, C, HW)                      # NCHW, spatial flat on lanes
    # (Cout, Cin, 3, 3) -> (tap = dy*3+dx, Cout, Cin), bf16 for native MXU rate.
    w1_9 = jnp.transpose(w1, (2, 3, 0, 1)).reshape(9, C, C).astype(jnp.bfloat16)
    w2_9 = jnp.transpose(w2, (2, 3, 0, 1)).reshape(9, C, C).astype(jnp.bfloat16)
    # Per-lane column index: lets the kernel build edge masks from comparisons
    # only (no (9, HW) f32 mask DMA, no in-kernel vector integer division).
    col_idx = jnp.tile(jnp.arange(W, dtype=jnp.int32), H).reshape(1, HW)

    roll_sign = 1 if _pltpu_roll_matches_jnp() else -1
    rolls = _conv_tap_rolls(H, W, roll_sign)
    vmem_limit = _vmem_limit_bytes()

    # TODO(synk): at production sizes add a second "parallel" grid axis over row
    # tiles (block (1, C, TH*W) with a +/-W lane halo) so v7x's two TensorCores
    # are used when N is small and the per-step working set fits 64 MiB; for
    # tiny C (like this test) pack several batch images onto the sublane axis.

    def call(tap_dtype, single_buffer_consts):
        kernel = functools.partial(resblock_kernel, H=H, W=W, rolls=rolls,
                                   eps=eps, tap_dtype=tap_dtype)
        const_kw = ({"pipeline_mode": pl.Buffered(1)}
                    if single_buffer_consts else {})
        return pl.pallas_call(
            kernel,
            out_shape=jax.ShapeDtypeStruct((N, C, HW), x_nchw.dtype),
            grid_spec=pltpu.PrefetchScalarGridSpec(
                num_scalar_prefetch=0,
                grid=(N,),
                in_specs=[
                    pl.BlockSpec((1, C, HW), lambda n: (n, 0, 0)),
                    pl.BlockSpec((9, C, C), lambda n: (0, 0, 0), **const_kw),
                    pl.BlockSpec((9, C, C), lambda n: (0, 0, 0), **const_kw),
                    pl.BlockSpec((1, HW), lambda n: (0, 0), **const_kw),
                ],
                out_specs=pl.BlockSpec((1, C, HW), lambda n: (n, 0, 0)),
            ),
            compiler_params=pltpu.CompilerParams(
                dimension_semantics=("parallel",),
                vmem_limit_bytes=vmem_limit,
            ),
        )(x2, w1_9, w2_9, col_idx)

    # Preferred config first (bf16 rolled taps for the MXU, single-buffered
    # grid-invariant operands); graceful fallbacks keep the kernel runnable on
    # jax/libtpu builds lacking Buffered(1) or packed-bf16 roll/select support.
    attempts = ((jnp.bfloat16, True), (jnp.bfloat16, False), (jnp.float32, False))
    out2, err = None, None
    for tap_dtype, single_buf in attempts:
        try:
            out2 = jax.block_until_ready(call(tap_dtype, single_buf))
            break
        except Exception as e:  # noqa: BLE001 - try the next compatibility config
            err = e
            out2 = None
    if out2 is None:
        raise err

    return out2.reshape(N, C, H, W)


# ---------------------------------------------------------------------------
# Pure-JAX reference (keeps the biases, exactly like the PyTorch module)
# ---------------------------------------------------------------------------
def _conv_nchw(x, w, b):
    y = jax.lax.conv_general_dilated(
        x, w, window_strides=(1, 1), padding=[(1, 1), (1, 1)],
        dimension_numbers=("NCHW", "OIHW", "NCHW"))
    return y + b[None, :, None, None]


def _instance_norm_ref(x, eps=1e-5):
    mean = x.mean(axis=(2, 3), keepdims=True)
    var = ((x - mean) ** 2).mean(axis=(2, 3), keepdims=True)
    return (x - mean) / jnp.sqrt(var + eps)


def resblock_ref(x, w1, b1, w2, b2):
    h = jax.nn.relu(_instance_norm_ref(_conv_nchw(x, w1, b1)))
    h = _instance_norm_ref(_conv_nchw(h, w2, b2))
    return x + h


if __name__ == "__main__":
    key = jax.random.PRNGKey(0)
    N, C, H, W = 2, 4, 16, 16   # dim = 4

    kx, kw1, kb1, kw2, kb2 = jax.random.split(key, 5)
    x = jax.random.normal(kx, (N, C, H, W), dtype=jnp.float32)
    w1 = jax.random.normal(kw1, (C, C, 3, 3), dtype=jnp.float32) * 0.1
    b1 = jax.random.normal(kb1, (C,), dtype=jnp.float32) * 0.1
    w2 = jax.random.normal(kw2, (C, C, 3, 3), dtype=jnp.float32) * 0.1
    b2 = jax.random.normal(kb2, (C,), dtype=jnp.float32) * 0.1

    out = jax.block_until_ready(resblock_pallas(x, w1, b1, w2, b2))
    ref = jax.block_until_ready(resblock_ref(x, w1, b1, w2, b2))

    assert out.shape == (N, C, H, W)
    max_err = float(jnp.max(jnp.abs(out - ref)))
    # Tolerance reflects bf16 MXU operands (f32 accumulation); the f32
    # reference keeps the exact PyTorch semantics.
    assert jnp.allclose(out, ref, atol=6e-2, rtol=6e-2), max_err

    print("KERNEL_OK")
</pallas_src>

<mosaic_0001>
module attributes {stable_mosaic.version = 11 : i64} {
  func.func @probe(%arg0: memref<8x128xf32, #tpu.memory_space<vmem>>, %arg1: memref<8x128xf32, #tpu.memory_space<vmem>>) attributes {dimension_semantics = [], scalar_prefetch = 0 : i64, scratch_operands = 0 : i64, tpu.core_type = #tpu.core_type<tc>} {
    %c0 = arith.constant 0 : index
    %c0_0 = arith.constant 0 : index
    %0 = vector.load %arg0[%c0, %c0_0] : memref<8x128xf32, #tpu.memory_space<vmem>>, vector<8x128xf32>
    %c1_i32 = arith.constant 1 : i32
    %1 = tpu.dynamic_rotate %0 by %c1_i32 dim 1 : vector<8x128xf32>, i32 -> vector<8x128xf32>
    %c0_1 = arith.constant 0 : index
    %c0_2 = arith.constant 0 : index
    %2 = vector.load %arg1[%c0_1, %c0_2] : memref<8x128xf32, #tpu.memory_space<vmem>>, vector<8x128xf32>
    tpu.vector_store %arg1[%c0_1, %c0_2], %1 {strides = array<i32>} : memref<8x128xf32, #tpu.memory_space<vmem>>, vector<8x128xf32>,
    return
  }
}

</mosaic_0001>

<llo_original>
// kernel: tpu_custom_call.1
$region0: #{tpu_custom_call.1}
  #allocation0 [shape = 'u32[]', space=smem, size = 0x4, offset = 0x4, fixed_abs, tag = 'smem constant byte address 0x4 - core index']
  #allocation1 [shape = 'u32[144,128]{1,0:T(1,128)}', space=vmem, size = 0x12000, scoped, tag = 'internal scratch']
  %s0 = inlined_call_operand.hbm [shape: f32[8,128], index: 0, kind: input, shape index: {}]
  %s1 = inlined_call_operand.hbm [shape: f32[8,128], index: 1, kind: output, shape index: {}]
  %s2 = sld [smem:[#allocation0]]
  $region18: #{tpu_custom_call.1} parent=0
    _
  %s4 = ssub.s32 1, %s2
  %s5 = scalar_select 0, %s4, %s2
  $region1: #{tpu_custom_call.1} parent=0
    #allocation2 [shape = 'u8[4096]{0}', space=vmem, size = 0x1000, scoped, tag = 'input window, operand 0, single buffered']
    #allocation3 [shape = 's32[1]{0}', space=sflag, size = 0x4, scoped, tag = 'scoped memory for tpu_custom_call.1']
    #allocation4 [shape = 's32[1]{0}', space=sflag, size = 0x4, scoped, tag = 'scoped memory for tpu_custom_call.1']
    #allocation5 [shape = 'u8[4096]{0}', space=vmem, size = 0x1000, scoped, tag = 'output window, operand 0, single buffered']
    %6 = vsyncpa [#allocation3], 0
    %7 = vsyncpa [#allocation4], 0
    // Predicated region
    $region2: #{tpu_custom_call.1} parent=1 // pred_check
      _
    $region3: #{tpu_custom_call.1} parent=1 // pred_check_branch
      %9 = sbr.rel (0) target = $region5
    $region4: #{tpu_custom_call.1} parent=1 // pred_region
      %s11 = ssub.s32 128, 128
      %12 = vsyncadd [#allocation3], %s11
      %s14 = sshll.u32 [#allocation2], 4
      %s15 = int_to_ptr.vmem [resolvable:$true] %s14
      %17 = dma.hbm_to_vmem [thread:$0]  %s0, 128, %s15, [#allocation3]
    $region5: #{tpu_custom_call.1} parent=1 // pred_fallthru
      _
    // Predicated region
    $region6: #{tpu_custom_call.1} parent=1 // pred_check
      _
    $region7: #{tpu_custom_call.1} parent=1 // pred_check_branch
      %19 = sbr.rel (0) target = $region9
    $region8: #{tpu_custom_call.1} parent=1 // pred_region
      %20 = dma.done [#allocation3], 128
    $region9: #{tpu_custom_call.1} parent=1 // pred_fallthru
      _
    %v21 = vld [vmem:[#allocation2] sm:$0xff]
    %22 = vrot.lane.b32.xlu0 %v21, 1
    %v23 = vpop.permute.xlu0 %22
    %24 = vst [vmem:[#allocation5] sm:$0xff] %v23
    // Predicated region
    $region10: #{tpu_custom_call.1} parent=1 // pred_check
      _
    $region11: #{tpu_custom_call.1} parent=1 // pred_check_branch
      %26 = sbr.rel (0) target = $region13
    $region12: #{tpu_custom_call.1} parent=1 // pred_region
      %s28 = ssub.s32 128, 128
      %29 = vsyncadd [#allocation4], %s28
      %s31 = sshll.u32 [#allocation5], 4
      %s32 = int_to_ptr.vmem [resolvable:$true] %s31
      %34 = dma.vmem_to_hbm [thread:$0]  %s32, 128, %s1, [#allocation4]
    $region13: #{tpu_custom_call.1} parent=1 // pred_fallthru
      _
    // Predicated region
    $region14: #{tpu_custom_call.1} parent=1 // pred_check
      _
    $region15: #{tpu_custom_call.1} parent=1 // pred_check_branch
      %36 = sbr.rel (0) target = $region17
    $region16: #{tpu_custom_call.1} parent=1 // pred_region
      %37 = dma.done [#allocation4], 128
    $region17: #{tpu_custom_call.1} parent=1 // pred_fallthru
      _
    %38 = vsyncpa [#allocation3], 1
    %39 = vsyncpa [#allocation4], 1

</llo_original>
